<compile_context>
chip_gen: v7x
topology: tpu7x:2x2x1
jax: 0.10.0
libtpu: 0.0.40
codegen_flags: <defaults>
</compile_context>

<pallas_src>
import jax
import jax.numpy as jnp
from jax.experimental import pallas as pl
from jax.experimental.pallas import tpu as pltpu

LANE = 128  # TPU lane width


def _round_up(x, m):
    return ((x + m - 1) // m) * m


def _mlp_kernel(x_ref,
                w1_ref, b1_ref,
                w2_ref, b2_ref,
                w3_ref, b3_ref,
                w4_ref, b4_ref,
                w5_ref, b5_ref,
                o_ref):
    """One batch tile of the 5-layer MLP. bf16 MXU inputs, f32 accumulate/elementwise."""
    h = x_ref[...].astype(jnp.bfloat16)  # in-kernel cast: x streams in as f32
    # fc1 + ReLU
    h = jnp.dot(h, w1_ref[...], preferred_element_type=jnp.float32) + b1_ref[...]
    h = jnp.maximum(h, 0.0).astype(jnp.bfloat16)
    # fc2 + ReLU
    h = jnp.dot(h, w2_ref[...], preferred_element_type=jnp.float32) + b2_ref[...]
    h = jnp.maximum(h, 0.0).astype(jnp.bfloat16)
    # fc3 + ReLU
    h = jnp.dot(h, w3_ref[...], preferred_element_type=jnp.float32) + b3_ref[...]
    h = jnp.maximum(h, 0.0).astype(jnp.bfloat16)
    # fc4 + ReLU (out lane-padded 32 -> 128 with zeros; free on the MXU, keeps lanes dense)
    h = jnp.dot(h, w4_ref[...], preferred_element_type=jnp.float32) + b4_ref[...]
    h = jnp.maximum(h, 0.0).astype(jnp.bfloat16)
    # fc5 (no activation; K padded 32 -> 128 with zeros, N stays num_classes)
    h = jnp.dot(h, w5_ref[...], preferred_element_type=jnp.float32) + b5_ref[...]
    o_ref[...] = h.astype(o_ref.dtype)  # narrow (masked) store: [tb, num_classes]


def prepare_params(params):
    """One-time weight prep (pad + bf16 cast) hoisted off the per-call hot path.

    Weights stored as [in, out], biases as [1, out].  Zero padding is exactly a
    no-op: padded fc4 columns produce ReLU(0+0)=0 and w5's padded K rows are 0.
    """
    w4 = jnp.pad(params["w4"], ((0, 0), (0, LANE - params["w4"].shape[1])))
    b4 = jnp.pad(params["b4"], ((0, 0), (0, LANE - params["b4"].shape[1])))
    w5 = jnp.pad(params["w5"], ((0, LANE - params["w5"].shape[0]), (0, 0)))
    return {
        "w1": params["w1"].astype(jnp.bfloat16), "b1": params["b1"],
        "w2": params["w2"].astype(jnp.bfloat16), "b2": params["b2"],
        "w3": params["w3"].astype(jnp.bfloat16), "b3": params["b3"],
        "w4": w4.astype(jnp.bfloat16),           "b4": b4,
        "w5": w5.astype(jnp.bfloat16),           "b5": params["b5"],
    }


def first_mlp_forward(x, prepped, *, batch_tile=4096):
    """x: [B, input_size] f32. prepped: output of prepare_params()."""
    B, in_size = x.shape
    num_classes = prepped["w5"].shape[1]

    # ---- batch tile: multiple of 8, capped by batch_tile, and capped so the
    #      grid has >= 4 steps when B allows (keeps both v7x TCs busy).
    tb = min(batch_tile, max(8, _round_up(-(-B // 4), 8)))
    b_pad = _round_up(B, tb)
    x_p = x if b_pad == B else jnp.pad(x, ((0, b_pad - B), (0, 0)))

    operands = (x_p,
                prepped["w1"], prepped["b1"],
                prepped["w2"], prepped["b2"],
                prepped["w3"], prepped["b3"],
                prepped["w4"], prepped["b4"],
                prepped["w5"], prepped["b5"])

    # weights/biases: whole-array blocks, constant index_map -> stay resident
    # across grid steps (verify residency in the Mosaic dump if perf regresses).
    def const_spec(a):
        return pl.BlockSpec(a.shape, lambda i: (0, 0))

    in_specs = [pl.BlockSpec((tb, in_size), lambda i: (i, 0))] + \
               [const_spec(a) for a in operands[1:]]
    out_specs = pl.BlockSpec((tb, num_classes), lambda i: (i, 0))

    flops_per_row = 2 * (in_size * 64 + 64 * 128 + 128 * 64
                         + 64 * LANE + LANE * num_classes)
    weight_bytes = sum(int(a.size) * a.dtype.itemsize for a in operands[1:])
    cost = pl.CostEstimate(
        flops=flops_per_row * b_pad,
        transcendentals=0,
        bytes_accessed=b_pad * (in_size * 4 + num_classes * 4) + weight_bytes,
    )

    out = pl.pallas_call(
        _mlp_kernel,
        out_shape=jax.ShapeDtypeStruct((b_pad, num_classes), jnp.float32),
        grid=(b_pad // tb,),
        in_specs=in_specs,
        out_specs=out_specs,
        compiler_params=pltpu.CompilerParams(
            dimension_semantics=("parallel",),      # megacore sharding on v7x
            vmem_limit_bytes=32 * 1024 * 1024,      # safe on v7x's 64 MiB VMEM
        ),
        cost_estimate=cost,
    )(*operands)

    return out[:B]


def init_params(key, input_size, num_classes):
    """Deterministic init mirroring nn.Linear shapes; weights stored as [in, out]."""
    dims = [(input_size, 64), (64, 128), (128, 64), (64, 32), (32, num_classes)]
    params = {}
    for idx, (fan_in, fan_out) in enumerate(dims, start=1):
        key, kw, kb = jax.random.split(key, 3)
        bound = 1.0 / jnp.sqrt(jnp.float32(fan_in))
        params[f"w{idx}"] = jax.random.uniform(
            kw, (fan_in, fan_out), jnp.float32, minval=-bound, maxval=bound)
        params[f"b{idx}"] = jax.random.uniform(
            kb, (1, fan_out), jnp.float32, minval=-bound, maxval=bound)
    return params


def reference_forward(x, params):
    """Plain-JAX reference with the same bf16-input / f32-accumulate precision choice."""
    h = x.astype(jnp.bfloat16)
    for idx in range(1, 5):
        h = jnp.dot(h, params[f"w{idx}"].astype(jnp.bfloat16),
                    preferred_element_type=jnp.float32) + params[f"b{idx}"]
        h = jnp.maximum(h, 0.0).astype(jnp.bfloat16)
    return jnp.dot(h, params["w5"].astype(jnp.bfloat16),
                   preferred_element_type=jnp.float32) + params["b5"]


if __name__ == "__main__":
    B = 8
    input_size = 16
    num_classes = 8

    key = jax.random.PRNGKey(0)
    key, kx = jax.random.split(key)
    x = jax.random.normal(kx, (B, input_size), jnp.float32)
    params = init_params(key, input_size, num_classes)
    prepped = prepare_params(params)  # one-time weight prep, off the hot path

    # small case (single grid step)
    out = jax.block_until_ready(first_mlp_forward(x, prepped))
    ref = reference_forward(x, params)
    assert out.shape == (B, num_classes)
    assert jnp.allclose(out, ref, atol=1e-3, rtol=1e-3), "mismatch vs JAX reference (small B)"

    # exercise the multi-step grid + batch-tail padding path
    B2 = 1037
    key, kx2 = jax.random.split(key)
    x2 = jax.random.normal(kx2, (B2, input_size), jnp.float32)
    out2 = jax.block_until_ready(first_mlp_forward(x2, prepped))
    ref2 = reference_forward(x2, params)
    assert out2.shape == (B2, num_classes)
    assert jnp.allclose(out2, ref2, atol=1e-3, rtol=1e-3), "mismatch vs JAX reference (large B)"

    print("KERNEL_OK")
</pallas_src>

<mosaic_0001>
module attributes {stable_mosaic.version = 11 : i64} {
  func.func @_mlp_kernel(%arg0: i32, %arg1: memref<8x16xf32, #tpu.memory_space<vmem>>, %arg2: memref<16x64xbf16, #tpu.memory_space<vmem>>, %arg3: memref<1x64xf32, #tpu.memory_space<vmem>>, %arg4: memref<64x128xbf16, #tpu.memory_space<vmem>>, %arg5: memref<1x128xf32, #tpu.memory_space<vmem>>, %arg6: memref<128x64xbf16, #tpu.memory_space<vmem>>, %arg7: memref<1x64xf32, #tpu.memory_space<vmem>>, %arg8: memref<64x128xbf16, #tpu.memory_space<vmem>>, %arg9: memref<1x128xf32, #tpu.memory_space<vmem>>, %arg10: memref<128x8xbf16, #tpu.memory_space<vmem>>, %arg11: memref<1x8xf32, #tpu.memory_space<vmem>>, %arg12: memref<8x8xf32, #tpu.memory_space<vmem>>) attributes {dimension_semantics = [#tpu.dimension_semantics<parallel>], iteration_bounds = array<i64: 1>, scalar_prefetch = 0 : i64, scratch_operands = 0 : i64, tpu.core_type = #tpu.core_type<tc>, window_params = [{transform_indices = @transform_0, window_bounds = array<i64: 8, 16>}, {pipeline_mode = #tpu.pipeline_mode<synchronous>, transform_indices = @transform_1, window_bounds = array<i64: 16, 64>}, {pipeline_mode = #tpu.pipeline_mode<synchronous>, transform_indices = @transform_2, window_bounds = array<i64: 1, 64>}, {pipeline_mode = #tpu.pipeline_mode<synchronous>, transform_indices = @transform_3, window_bounds = array<i64: 64, 128>}, {pipeline_mode = #tpu.pipeline_mode<synchronous>, transform_indices = @transform_4, window_bounds = array<i64: 1, 128>}, {pipeline_mode = #tpu.pipeline_mode<synchronous>, transform_indices = @transform_5, window_bounds = array<i64: 128, 64>}, {pipeline_mode = #tpu.pipeline_mode<synchronous>, transform_indices = @transform_6, window_bounds = array<i64: 1, 64>}, {pipeline_mode = #tpu.pipeline_mode<synchronous>, transform_indices = @transform_7, window_bounds = array<i64: 64, 128>}, {pipeline_mode = #tpu.pipeline_mode<synchronous>, transform_indices = @transform_8, window_bounds = array<i64: 1, 128>}, {pipeline_mode = #tpu.pipeline_mode<synchronous>, transform_indices = @transform_9, window_bounds = array<i64: 128, 8>}, {pipeline_mode = #tpu.pipeline_mode<synchronous>, transform_indices = @transform_10, window_bounds = array<i64: 1, 8>}, {transform_indices = @transform_11, window_bounds = array<i64: 8, 8>}]} {
    %c0 = arith.constant 0 : index
    %c0_0 = arith.constant 0 : index
    %0 = vector.load %arg1[%c0, %c0_0] : memref<8x16xf32, #tpu.memory_space<vmem>>, vector<8x16xf32>
    %1 = arith.truncf %0 : vector<8x16xf32> to vector<8x16xbf16>
    %c0_1 = arith.constant 0 : index
    %c0_2 = arith.constant 0 : index
    %2 = vector.load %arg2[%c0_1, %c0_2] : memref<16x64xbf16, #tpu.memory_space<vmem>>, vector<16x64xbf16>
    %cst = arith.constant dense<0.000000e+00> : vector<8x64xf32>
    %3 = tpu.matmul %1, %2, %cst {dimension_numbers = #tpu.dot_dimension_numbers<[1], [0], [0], [1], [0, 0, 1, 1], [], []>} : vector<8x16xbf16>, vector<16x64xbf16>, vector<8x64xf32> -> vector<8x64xf32>
    %c0_3 = arith.constant 0 : index
    %c0_4 = arith.constant 0 : index
    %4 = vector.load %arg3[%c0_3, %c0_4] : memref<1x64xf32, #tpu.memory_space<vmem>>, vector<1x64xf32>
    %5 = vector.broadcast %4 : vector<1x64xf32> to vector<8x64xf32>
    %6 = arith.addf %3, %5 : vector<8x64xf32>
    %cst_5 = arith.constant 0.000000e+00 : f32
    %7 = vector.broadcast %cst_5 : f32 to vector<8x64xf32>
    %8 = arith.maximumf %6, %7 : vector<8x64xf32>
    %9 = arith.truncf %8 : vector<8x64xf32> to vector<8x64xbf16>
    %c0_6 = arith.constant 0 : index
    %c0_7 = arith.constant 0 : index
    %10 = vector.load %arg4[%c0_6, %c0_7] : memref<64x128xbf16, #tpu.memory_space<vmem>>, vector<64x128xbf16>
    %cst_8 = arith.constant dense<0.000000e+00> : vector<8x128xf32>
    %11 = tpu.matmul %9, %10, %cst_8 {dimension_numbers = #tpu.dot_dimension_numbers<[1], [0], [0], [1], [0, 0, 1, 1], [], []>} : vector<8x64xbf16>, vector<64x128xbf16>, vector<8x128xf32> -> vector<8x128xf32>
    %c0_9 = arith.constant 0 : index
    %c0_10 = arith.constant 0 : index
    %12 = vector.load %arg5[%c0_9, %c0_10] : memref<1x128xf32, #tpu.memory_space<vmem>>, vector<1x128xf32>
    %13 = vector.broadcast %12 : vector<1x128xf32> to vector<8x128xf32>
    %14 = arith.addf %11, %13 : vector<8x128xf32>
    %cst_11 = arith.constant 0.000000e+00 : f32
    %15 = vector.broadcast %cst_11 : f32 to vector<8x128xf32>
    %16 = arith.maximumf %14, %15 : vector<8x128xf32>
    %17 = arith.truncf %16 : vector<8x128xf32> to vector<8x128xbf16>
    %c0_12 = arith.constant 0 : index
    %c0_13 = arith.constant 0 : index
    %18 = vector.load %arg6[%c0_12, %c0_13] : memref<128x64xbf16, #tpu.memory_space<vmem>>, vector<128x64xbf16>
    %cst_14 = arith.constant dense<0.000000e+00> : vector<8x64xf32>
    %19 = tpu.matmul %17, %18, %cst_14 {dimension_numbers = #tpu.dot_dimension_numbers<[1], [0], [0], [1], [0, 0, 1, 1], [], []>} : vector<8x128xbf16>, vector<128x64xbf16>, vector<8x64xf32> -> vector<8x64xf32>
    %c0_15 = arith.constant 0 : index
    %c0_16 = arith.constant 0 : index
    %20 = vector.load %arg7[%c0_15, %c0_16] : memref<1x64xf32, #tpu.memory_space<vmem>>, vector<1x64xf32>
    %21 = vector.broadcast %20 : vector<1x64xf32> to vector<8x64xf32>
    %22 = arith.addf %19, %21 : vector<8x64xf32>
    %cst_17 = arith.constant 0.000000e+00 : f32
    %23 = vector.broadcast %cst_17 : f32 to vector<8x64xf32>
    %24 = arith.maximumf %22, %23 : vector<8x64xf32>
    %25 = arith.truncf %24 : vector<8x64xf32> to vector<8x64xbf16>
    %c0_18 = arith.constant 0 : index
    %c0_19 = arith.constant 0 : index
    %26 = vector.load %arg8[%c0_18, %c0_19] : memref<64x128xbf16, #tpu.memory_space<vmem>>, vector<64x128xbf16>
    %cst_20 = arith.constant dense<0.000000e+00> : vector<8x128xf32>
    %27 = tpu.matmul %25, %26, %cst_20 {dimension_numbers = #tpu.dot_dimension_numbers<[1], [0], [0], [1], [0, 0, 1, 1], [], []>} : vector<8x64xbf16>, vector<64x128xbf16>, vector<8x128xf32> -> vector<8x128xf32>
    %c0_21 = arith.constant 0 : index
    %c0_22 = arith.constant 0 : index
    %28 = vector.load %arg9[%c0_21, %c0_22] : memref<1x128xf32, #tpu.memory_space<vmem>>, vector<1x128xf32>
    %29 = vector.broadcast %28 : vector<1x128xf32> to vector<8x128xf32>
    %30 = arith.addf %27, %29 : vector<8x128xf32>
    %cst_23 = arith.constant 0.000000e+00 : f32
    %31 = vector.broadcast %cst_23 : f32 to vector<8x128xf32>
    %32 = arith.maximumf %30, %31 : vector<8x128xf32>
    %33 = arith.truncf %32 : vector<8x128xf32> to vector<8x128xbf16>
    %c0_24 = arith.constant 0 : index
    %c0_25 = arith.constant 0 : index
    %34 = vector.load %arg10[%c0_24, %c0_25] : memref<128x8xbf16, #tpu.memory_space<vmem>>, vector<128x8xbf16>
    %cst_26 = arith.constant dense<0.000000e+00> : vector<8x8xf32>
    %35 = tpu.matmul %33, %34, %cst_26 {dimension_numbers = #tpu.dot_dimension_numbers<[1], [0], [0], [1], [0, 0, 1, 1], [], []>} : vector<8x128xbf16>, vector<128x8xbf16>, vector<8x8xf32> -> vector<8x8xf32>
    %c0_27 = arith.constant 0 : index
    %c0_28 = arith.constant 0 : index
    %36 = vector.load %arg11[%c0_27, %c0_28] : memref<1x8xf32, #tpu.memory_space<vmem>>, vector<1x8xf32>
    %37 = vector.broadcast %36 : vector<1x8xf32> to vector<8x8xf32>
    %38 = arith.addf %35, %37 : vector<8x8xf32>
    %c0_29 = arith.constant 0 : index
    %c0_30 = arith.constant 0 : index
    %39 = vector.load %arg12[%c0_29, %c0_30] : memref<8x8xf32, #tpu.memory_space<vmem>>, vector<8x8xf32>
    tpu.vector_store %arg12[%c0_29, %c0_30], %38 {strides = array<i32>} : memref<8x8xf32, #tpu.memory_space<vmem>>, vector<8x8xf32>,
    return
  }
  func.func @transform_0(%arg0: i32) -> (i32, i32) {
    %c0_i32 = arith.constant 0 : i32
    %c0_i32_0 = arith.constant 0 : i32
    return %arg0, %c0_i32 : i32, i32
  }
  func.func @transform_1(%arg0: i32) -> (i32, i32) {
    %c0_i32 = arith.constant 0 : i32
    %c0_i32_0 = arith.constant 0 : i32
    %c0_i32_1 = arith.constant 0 : i32
    return %c0_i32, %c0_i32_0 : i32, i32
  }
  func.func @transform_2(%arg0: i32) -> (i32, i32) {
    %c0_i32 = arith.constant 0 : i32
    %c0_i32_0 = arith.constant 0 : i32
    %c0_i32_1 = arith.constant 0 : i32
    return %c0_i32, %c0_i32_0 : i32, i32
  }
  func.func @transform_3(%arg0: i32) -> (i32, i32) {
    %c0_i32 = arith.constant 0 : i32
    %c0_i32_0 = arith.constant 0 : i32
    %c0_i32_1 = arith.constant 0 : i32
    return %c0_i32, %c0_i32_0 : i32, i32
  }
  func.func @transform_4(%arg0: i32) -> (i32, i32) {
    %c0_i32 = arith.constant 0 : i32
    %c0_i32_0 = arith.constant 0 : i32
    %c0_i32_1 = arith.constant 0 : i32
    return %c0_i32, %c0_i32_0 : i32, i32
  }
  func.func @transform_5(%arg0: i32) -> (i32, i32) {
    %c0_i32 = arith.constant 0 : i32
    %c0_i32_0 = arith.constant 0 : i32
    %c0_i32_1 = arith.constant 0 : i32
    return %c0_i32, %c0_i32_0 : i32, i32
  }
  func.func @transform_6(%arg0: i32) -> (i32, i32) {
    %c0_i32 = arith.constant 0 : i32
    %c0_i32_0 = arith.constant 0 : i32
    %c0_i32_1 = arith.constant 0 : i32
    return %c0_i32, %c0_i32_0 : i32, i32
  }
  func.func @transform_7(%arg0: i32) -> (i32, i32) {
    %c0_i32 = arith.constant 0 : i32
    %c0_i32_0 = arith.constant 0 : i32
    %c0_i32_1 = arith.constant 0 : i32
    return %c0_i32, %c0_i32_0 : i32, i32
  }
  func.func @transform_8(%arg0: i32) -> (i32, i32) {
    %c0_i32 = arith.constant 0 : i32
    %c0_i32_0 = arith.constant 0 : i32
    %c0_i32_1 = arith.constant 0 : i32
    return %c0_i32, %c0_i32_0 : i32, i32
  }
  func.func @transform_9(%arg0: i32) -> (i32, i32) {
    %c0_i32 = arith.constant 0 : i32
    %c0_i32_0 = arith.constant 0 : i32
    %c0_i32_1 = arith.constant 0 : i32
    return %c0_i32, %c0_i32_0 : i32, i32
  }
  func.func @transform_10(%arg0: i32) -> (i32, i32) {
    %c0_i32 = arith.constant 0 : i32
    %c0_i32_0 = arith.constant 0 : i32
    %c0_i32_1 = arith.constant 0 : i32
    return %c0_i32, %c0_i32_0 : i32, i32
  }
  func.func @transform_11(%arg0: i32) -> (i32, i32) {
    %c0_i32 = arith.constant 0 : i32
    %c0_i32_0 = arith.constant 0 : i32
    return %arg0, %c0_i32 : i32, i32
  }
}

</mosaic_0001>

<llo_original>
// kernel: tpu_custom_call.1
$region0: #{tpu_custom_call.1}
  #allocation0 [shape = 'u32[]', space=smem, size = 0x4, offset = 0x4, fixed_abs, tag = 'smem constant byte address 0x4 - core index']
  #allocation1 [shape = 'u32[144,128]{1,0:T(1,128)}', space=vmem, size = 0x12000, scoped, tag = 'internal scratch']
  %s0 = inlined_call_operand.vmem [shape: f32[8,16], index: 0, kind: input, shape index: {}]
  %s1 = inlined_call_operand.vmem [shape: bf16[16,64], index: 1, kind: input, shape index: {}]
  %s2 = inlined_call_operand.vmem [shape: f32[1,64], index: 2, kind: input, shape index: {}]
  %s3 = inlined_call_operand.vmem [shape: bf16[64,128], index: 3, kind: input, shape index: {}]
  %s4 = inlined_call_operand.vmem [shape: f32[1,128], index: 4, kind: input, shape index: {}]
  %s5 = inlined_call_operand.vmem [shape: bf16[128,64], index: 5, kind: input, shape index: {}]
  %s6 = inlined_call_operand.vmem [shape: f32[1,64], index: 6, kind: input, shape index: {}]
  %s7 = inlined_call_operand.vmem [shape: bf16[64,128], index: 7, kind: input, shape index: {}]
  %s8 = inlined_call_operand.vmem [shape: f32[1,128], index: 8, kind: input, shape index: {}]
  %s9 = inlined_call_operand.vmem [shape: bf16[128,8], index: 9, kind: input, shape index: {}]
  %s10 = inlined_call_operand.vmem [shape: f32[1,8], index: 10, kind: input, shape index: {}]
  %s11 = inlined_call_operand.hbm [shape: f32[8,8], index: 11, kind: output, shape index: {}]
  %s12 = sld [smem:[#allocation0]]
  $region54: #{tpu_custom_call.1} parent=0
    _
  %s14 = ssub.s32 1, %s12
  %s15 = scalar_select 0, %s14, %s12
  $region1: #{tpu_custom_call.1} parent=0
    #allocation2 [shape = 'u8[4096]{0}', space=vmem, size = 0x1000, scoped, tag = 'output window, operand 0, single buffered']
    #allocation3 [shape = 's32[1]{0}', space=sflag, size = 0x4, scoped, tag = 'scoped memory for tpu_custom_call.1']
    %16 = vsyncpa [#allocation3], 0
    // Predicated region
    $region2: #{tpu_custom_call.1} parent=1 // pred_check
      _
    $region3: #{tpu_custom_call.1} parent=1 // pred_check_branch
      %18 = sbr.rel (0) target = $region5
    $region4: #{tpu_custom_call.1} parent=1 // pred_region
      _
    $region5: #{tpu_custom_call.1} parent=1 // pred_fallthru
      _
    // Predicated region
    $region6: #{tpu_custom_call.1} parent=1 // pred_check
      _
    $region7: #{tpu_custom_call.1} parent=1 // pred_check_branch
      %20 = sbr.rel (0) target = $region9
    $region8: #{tpu_custom_call.1} parent=1 // pred_region
      _
    $region9: #{tpu_custom_call.1} parent=1 // pred_fallthru
      _
    // Predicated region
    $region10: #{tpu_custom_call.1} parent=1 // pred_check
      _
    $region11: #{tpu_custom_call.1} parent=1 // pred_check_branch
      %22 = sbr.rel (0) target = $region13
    $region12: #{tpu_custom_call.1} parent=1 // pred_region
      _
    $region13: #{tpu_custom_call.1} parent=1 // pred_fallthru
      _
    // Predicated region
    $region14: #{tpu_custom_call.1} parent=1 // pred_check
      _
    $region15: #{tpu_custom_call.1} parent=1 // pred_check_branch
      %24 = sbr.rel (0) target = $region17
    $region16: #{tpu_custom_call.1} parent=1 // pred_region
      _
    $region17: #{tpu_custom_call.1} parent=1 // pred_fallthru
      _
    // Predicated region
    $region18: #{tpu_custom_call.1} parent=1 // pred_check
      _
    $region19: #{tpu_custom_call.1} parent=1 // pred_check_branch
      %26 = sbr.rel (0) target = $region21
    $region20: #{tpu_custom_call.1} parent=1 // pred_region
      _
    $region21: #{tpu_custom_call.1} parent=1 // pred_fallthru
      _
    // Predicated region
    $region22: #{tpu_custom_call.1} parent=1 // pred_check
      _
    $region23: #{tpu_custom_call.1} parent=1 // pred_check_branch
      %28 = sbr.rel (0) target = $region25
    $region24: #{tpu_custom_call.1} parent=1 // pred_region
      _
    $region25: #{tpu_custom_call.1} parent=1 // pred_fallthru
      _
    // Predicated region
    $region26: #{tpu_custom_call.1} parent=1 // pred_check
      _
    $region27: #{tpu_custom_call.1} parent=1 // pred_check_branch
      %30 = sbr.rel (0) target = $region29
    $region28: #{tpu_custom_call.1} parent=1 // pred_region
      _
    $region29: #{tpu_custom_call.1} parent=1 // pred_fallthru
      _
    // Predicated region
    $region30: #{tpu_custom_call.1} parent=1 // pred_check
      _
    $region31: #{tpu_custom_call.1} parent=1 // pred_check_branch
      %32 = sbr.rel (0) target = $region33
    $region32: #{tpu_custom_call.1} parent=1 // pred_region
      _
    $region33: #{tpu_custom_call.1} parent=1 // pred_fallthru
      _
    // Predicated region
    $region34: #{tpu_custom_call.1} parent=1 // pred_check
      _
    $region35: #{tpu_custom_call.1} parent=1 // pred_check_branch
      %34 = sbr.rel (0) target = $region37
    $region36: #{tpu_custom_call.1} parent=1 // pred_region
      _
    $region37: #{tpu_custom_call.1} parent=1 // pred_fallthru
      _
    // Predicated region
    $region38: #{tpu_custom_call.1} parent=1 // pred_check
      _
    $region39: #{tpu_custom_call.1} parent=1 // pred_check_branch
      %36 = sbr.rel (0) target = $region41
    $region40: #{tpu_custom_call.1} parent=1 // pred_region
      _
    $region41: #{tpu_custom_call.1} parent=1 // pred_fallthru
      _
    // Predicated region
    $region42: #{tpu_custom_call.1} parent=1 // pred_check
      _
    $region43: #{tpu_custom_call.1} parent=1 // pred_check_branch
      %38 = sbr.rel (0) target = $region45
    $region44: #{tpu_custom_call.1} parent=1 // pred_region
      _
    $region45: #{tpu_custom_call.1} parent=1 // pred_fallthru
      _
    %v40 = vld [vmem:[%s0] sm:$0xff]
    %v41 = vpack.c.bf16 %v40, %v40
    %v42 = vld [vmem:[%s1] sm:$0xf]
    %v43 = vld [vmem:[%s1 + $0x4] sm:$0xf]
    %v44 = vld [vmem:[%s2] sm:$0x1]
    %v46 = vlaneseq
    %v47 = vshrl.u32 %v46, 7
    %v48 = vsub.s32 0, %v47
    %v49 = vrot.slane %v44, %v48
    %v53 = vunpack.c.l.b16 %v42
    %v54 = vunpack.c.l.b16 %v43
    %v55 = vpack.c.b16 %v54, %v53
    %vm57 = vcmask 130048
    %v59 = vsel %vm57, %v41, 0
    %61 = vmatprep.subr.bf16.mxu0 0
    %62 = vmatpush1.bf16.msra.mxu0 %v55
    %63 = vmatprep.subr.bf16.mxu0 0
    %64 = vmatpush1.bf16.msra.mxu0 0
    %65 = vmatprep.subr.bf16.mxu0 0
    %66 = vmatpush1.bf16.msra.mxu0 0
    %67 = vmatprep.subr.bf16.mxu0 0
    %68 = vmatpush1.bf16.msra.mxu0 0
    %69 = vmatprep.subr.bf16.mxu0 0
    %70 = vmatpush1.bf16.msra.mxu0 0
    %71 = vmatprep.subr.bf16.mxu0 0
    %72 = vmatpush1.bf16.msra.mxu0 0
    %73 = vmatprep.subr.bf16.mxu0 0
    %74 = vmatpush1.bf16.msra.mxu0 0
    %75 = vmatprep.subr.bf16.mxu0 0
    %76 = vmatpush1.bf16.msra.mxu0 0
    %77 = vmatprep.subr.bf16.mxu0 0
    %78 = vmatpush1.bf16.msra.mxu0 0
    %79 = vmatprep.subr.bf16.mxu0 0
    %80 = vmatpush1.bf16.msra.mxu0 0
    %81 = vmatprep.subr.bf16.mxu0 0
    %82 = vmatpush1.bf16.msra.mxu0 0
    %83 = vmatprep.subr.bf16.mxu0 0
    %84 = vmatpush1.bf16.msra.mxu0 0
    %85 = vmatprep.subr.bf16.mxu0 0
    %86 = vmatpush1.bf16.msra.mxu0 0
    %87 = vmatprep.subr.bf16.mxu0 0
    %88 = vmatpush1.bf16.msra.mxu0 0
    %89 = vmatprep.subr.bf16.mxu0 0
    %90 = vmatpush1.bf16.msra.mxu0 0
    %91 = vmatprep.subr.bf16.mxu0 0
    %92 = vmatpush1.bf16.msra.mxu0 0
    %93 = vmatprep.mubr.bf16.mxu0 0
    %94 = vmatmul.mubr.bf16.gmra.mrb[0].mxu0 %v59
    %v95 = vpop.f32.mrb[0].mxu0
    %v96 = vadd.f32 %v49, %v95
    %v97 = vpop.f32.mrb[0].mxu0
    %v98 = vpop.f32.mrb[0].mxu0
    %v99 = vpop.f32.mrb[0].mxu0
    %100 = vdwg.mxu0
    %v101 = vmax.f32 %v96, 0.0
    %v102 = vpack.c.bf16 %v101, %v101
    %v103 = vld [vmem:[%s3] sm:$0xf]
    %v104 = vld [vmem:[%s3 + $0x4] sm:$0xf]
    %v105 = vld [vmem:[%s3 + $0x8] sm:$0xf]
    %v106 = vld [vmem:[%s3 + $0xc] sm:$0xf]
    %v107 = vld [vmem:[%s3 + $0x10] sm:$0xf]
    %v108 = vld [vmem:[%s3 + $0x14] sm:$0xf]
    %v109 = vld [vmem:[%s3 + $0x18] sm:$0xf]
    %v110 = vld [vmem:[%s3 + $0x1c] sm:$0xf]
    %v111 = vld [vmem:[%s4] sm:$0x1]
    %v113 = vlaneseq
    %v114 = vshrl.u32 %v113, 7
    %v115 = vsub.s32 0, %v114
    %v116 = vrot.slane %v111, %v115
    %v126 = vunpack.c.l.b16 %v103
    %v127 = vunpack.c.l.b16 %v104
    %v128 = vunpack.c.l.b16 %v105
    %v129 = vunpack.c.l.b16 %v106
    %v130 = vunpack.c.l.b16 %v107
    %v131 = vunpack.c.l.b16 %v108
    %v132 = vunpack.c.l.b16 %v109
    %v133 = vunpack.c.l.b16 %v110
    %v134 = vpack.c.b16 %v127, %v126
    %v135 = vpack.c.b16 %v129, %v128
    %v136 = vpack.c.b16 %v131, %v130
    %v137 = vpack.c.b16 %v133, %v132
    %vm142 = vcmask 523264
    %v144 = vsel %vm142, %v102, 0
    %146 = vmatprep.subr.bf16.mxu0 0
    %147 = vmatpush1.bf16.msra.mxu0 %v134
    %148 = vmatprep.subr.bf16.mxu0 0
    %149 = vmatpush1.bf16.msra.mxu0 %v135
    %150 = vmatprep.subr.bf16.mxu0 0
    %151 = vmatpush1.bf16.msra.mxu0 %v136
    %152 = vmatprep.subr.bf16.mxu0 0
    %153 = vmatpush1.bf16.msra.mxu0 %v137
    %154 = vmatprep.subr.bf16.mxu0 0
    %155 = vmatpush1.bf16.msra.mxu0 0
    %156 = vmatprep.subr.bf16.mxu0 0
    %157 = vmatpush1.bf16.msra.mxu0 0
    %158 = vmatprep.subr.bf16.mxu0 0
    %159 = vmatpush1.bf16.msra.mxu0 0
    %160 = vmatprep.subr.bf16.mxu0 0
    %161 = vmatpush1.bf16.msra.mxu0 0
    %162 = vmatprep.subr.bf16.mxu0 0
    %163 = vmatpush1.bf16.msra.mxu0 0
    %164 = vmatprep.subr.bf16.mxu0 0
    %165 = vmatpush1.bf16.msra.mxu0 0
    %166 = vmatprep.subr.bf16.mxu0 0
    %167 = vmatpush1.bf16.msra.mxu0 0
    %168 = vmatprep.subr.bf16.mxu0 0
    %169 = vmatpush1.bf16.msra.mxu0 0
    %170 = vmatprep.subr.bf16.mxu0 0
    %171 = vmatpush1.bf16.msra.mxu0 0
    %172 = vmatprep.subr.bf16.mxu0 0
    %173 = vmatpush1.bf16.msra.mxu0 0
    %174 = vmatprep.subr.bf16.mxu0 0
    %175 = vmatpush1.bf16.msra.mxu0 0
    %176 = vmatprep.subr.bf16.mxu0 0
    %177 = vmatpush1.bf16.msra.mxu0 0
    %178 = vmatprep.mubr.bf16.mxu0 0
    %179 = vmatmul.mubr.bf16.gmra.mrb[0].mxu0 %v144
    %v180 = vpop.f32.mrb[0].mxu0
    %v181 = vadd.f32 %v116, %v180
    %v182 = vpop.f32.mrb[0].mxu0
    %v183 = vpop.f32.mrb[0].mxu0
    %v184 = vpop.f32.mrb[0].mxu0
    %185 = vdwg.mxu0
    %v186 = vmax.f32 %v181, 0.0
    %v187 = vpack.c.bf16 %v186, %v186
    %v188 = vld [vmem:[%s5] sm:$0xf]
    %v189 = vld [vmem:[%s5 + $0x4] sm:$0xf]
    %v190 = vld [vmem:[%s5 + $0x8] sm:$0xf]
    %v191 = vld [vmem:[%s5 + $0xc] sm:$0xf]
    %v192 = vld [vmem:[%s5 + $0x10] sm:$0xf]
    %v193 = vld [vmem:[%s5 + $0x14] sm:$0xf]
    %v194 = vld [vmem:[%s5 + $0x18] sm:$0xf]
    %v195 = vld [vmem:[%s5 + $0x1c] sm:$0xf]
    %v196 = vld [vmem:[%s5 + $0x20] sm:$0xf]
    %v197 = vld [vmem:[%s5 + $0x24] sm:$0xf]
    %v198 = vld [vmem:[%s5 + $0x28] sm:$0xf]
    %v199 = vld [vmem:[%s5 + $0x2c] sm:$0xf]
    %v200 = vld [vmem:[%s5 + $0x30] sm:$0xf]
    %v201 = vld [vmem:[%s5 + $0x34] sm:$0xf]
    %v202 = vld [vmem:[%s5 + $0x38] sm:$0xf]
    %v203 = vld [vmem:[%s5 + $0x3c] sm:$0xf]
    %v204 = vld [vmem:[%s6] sm:$0x1]
    %v206 = vlaneseq
    %v207 = vshrl.u32 %v206, 7
    %v208 = vsub.s32 0, %v207
    %v209 = vrot.slane %v204, %v208
    %v227 = vunpack.c.l.b16 %v188
    %v228 = vunpack.c.l.b16 %v189
    %v229 = vunpack.c.l.b16 %v190
    %v230 = vunpack.c.l.b16 %v191
    %v231 = vunpack.c.l.b16 %v192
    %v232 = vunpack.c.l.b16 %v193
    %v233 = vunpack.c.l.b16 %v194
    %v234 = vunpack.c.l.b16 %v195
    %v235 = vunpack.c.l.b16 %v196
    %v236 = vunpack.c.l.b16 %v197
    %v237 = vunpack.c.l.b16 %v198
    %v238 = vunpack.c.l.b16 %v199
    %v239 = vunpack.c.l.b16 %v200
    %v240 = vunpack.c.l.b16 %v201
    %v241 = vunpack.c.l.b16 %v202
    %v242 = vunpack.c.l.b16 %v203
    %v243 = vpack.c.b16 %v228, %v227
    %v244 = vpack.c.b16 %v230, %v229
    %v245 = vpack.c.b16 %v232, %v231
    %v246 = vpack.c.b16 %v234, %v233
    %v247 = vpack.c.b16 %v236, %v235
    %v248 = vpack.c.b16 %v238, %v237
    %v249 = vpack.c.b16 %v240, %v239
    %v250 = vpack.c.b16 %v242, %v241
    %259 = vmatprep.subr.bf16.mxu0 0
    %260 = vmatpush1.bf16.msra.mxu0 %v243
    %261 = vmatprep.subr.bf16.mxu0 0
    %262 = vmatpush1.bf16.msra.mxu0 %v244
    %263 = vmatprep.subr.bf16.mxu0 0
    %264 = vmatpush1.bf16.msra.mxu0 %v245
    %265 = vmatprep.subr.bf16.mxu0 0
    %266 = vmatpush1.bf16.msra.mxu0 %v246
    %267 = vmatprep.subr.bf16.mxu0 0
    %268 = vmatpush1.bf16.msra.mxu0 %v247
    %269 = vmatprep.subr.bf16.mxu0 0
    %270 = vmatpush1.bf16.msra.mxu0 %v248
    %271 = vmatprep.subr.bf16.mxu0 0
    %272 = vmatpush1.bf16.msra.mxu0 %v249
    %273 = vmatprep.subr.bf16.mxu0 0
    %274 = vmatpush1.bf16.msra.mxu0 %v250
    %275 = vmatprep.subr.bf16.mxu0 0
    %276 = vmatpush1.bf16.msra.mxu0 0
    %277 = vmatprep.subr.bf16.mxu0 0
    %278 = vmatpush1.bf16.msra.mxu0 0
    %279 = vmatprep.subr.bf16.mxu0 0
    %280 = vmatpush1.bf16.msra.mxu0 0
    %281 = vmatprep.subr.bf16.mxu0 0
    %282 = vmatpush1.bf16.msra.mxu0 0
    %283 = vmatprep.subr.bf16.mxu0 0
    %284 = vmatpush1.bf16.msra.mxu0 0
    %285 = vmatprep.subr.bf16.mxu0 0
    %286 = vmatpush1.bf16.msra.mxu0 0
    %287 = vmatprep.subr.bf16.mxu0 0
    %288 = vmatpush1.bf16.msra.mxu0 0
    %289 = vmatprep.subr.bf16.mxu0 0
    %290 = vmatpush1.bf16.msra.mxu0 0
    %291 = vmatprep.mubr.bf16.mxu0 0
    %292 = vmatmul.mubr.bf16.gmra.mrb[0].mxu0 %v187
    %v293 = vpop.f32.mrb[0].mxu0
    %v294 = vadd.f32 %v209, %v293
    %v295 = vpop.f32.mrb[0].mxu0
    %v296 = vpop.f32.mrb[0].mxu0
    %v297 = vpop.f32.mrb[0].mxu0
    %298 = vdwg.mxu0
    %v299 = vmax.f32 %v294, 0.0
    %v300 = vpack.c.bf16 %v299, %v299
    %v301 = vld [vmem:[%s7] sm:$0xf]
    %v302 = vld [vmem:[%s7 + $0x4] sm:$0xf]
    %v303 = vld [vmem:[%s7 + $0x8] sm:$0xf]
    %v304 = vld [vmem:[%s7 + $0xc] sm:$0xf]
    %v305 = vld [vmem:[%s7 + $0x10] sm:$0xf]
    %v306 = vld [vmem:[%s7 + $0x14] sm:$0xf]
    %v307 = vld [vmem:[%s7 + $0x18] sm:$0xf]
    %v308 = vld [vmem:[%s7 + $0x1c] sm:$0xf]
    %v309 = vld [vmem:[%s8] sm:$0x1]
    %v311 = vlaneseq
    %v312 = vshrl.u32 %v311, 7
    %v313 = vsub.s32 0, %v312
    %v314 = vrot.slane %v309, %v313
    %v324 = vunpack.c.l.b16 %v301
    %v325 = vunpack.c.l.b16 %v302
    %v326 = vunpack.c.l.b16 %v303
    %v327 = vunpack.c.l.b16 %v304
    %v328 = vunpack.c.l.b16 %v305
    %v329 = vunpack.c.l.b16 %v306
    %v330 = vunpack.c.l.b16 %v307
    %v331 = vunpack.c.l.b16 %v308
    %v332 = vpack.c.b16 %v325, %v324
    %v333 = vpack.c.b16 %v327, %v326
    %v334 = vpack.c.b16 %v329, %v328
    %v335 = vpack.c.b16 %v331, %v330
    %v341 = vsel %vm142, %v300, 0
    %343 = vmatprep.subr.bf16.mxu0 0
    %344 = vmatpush1.bf16.msra.mxu0 %v332
    %345 = vmatprep.subr.bf16.mxu0 0
    %346 = vmatpush1.bf16.msra.mxu0 %v333
    %347 = vmatprep.subr.bf16.mxu0 0
    %348 = vmatpush1.bf16.msra.mxu0 %v334
    %349 = vmatprep.subr.bf16.mxu0 0
    %350 = vmatpush1.bf16.msra.mxu0 %v335
    %351 = vmatprep.subr.bf16.mxu0 0
    %352 = vmatpush1.bf16.msra.mxu0 0
    %353 = vmatprep.subr.bf16.mxu0 0
    %354 = vmatpush1.bf16.msra.mxu0 0
    %355 = vmatprep.subr.bf16.mxu0 0
    %356 = vmatpush1.bf16.msra.mxu0 0
    %357 = vmatprep.subr.bf16.mxu0 0
    %358 = vmatpush1.bf16.msra.mxu0 0
    %359 = vmatprep.subr.bf16.mxu0 0
    %360 = vmatpush1.bf16.msra.mxu0 0
    %361 = vmatprep.subr.bf16.mxu0 0
    %362 = vmatpush1.bf16.msra.mxu0 0
    %363 = vmatprep.subr.bf16.mxu0 0
    %364 = vmatpush1.bf16.msra.mxu0 0
    %365 = vmatprep.subr.bf16.mxu0 0
    %366 = vmatpush1.bf16.msra.mxu0 0
    %367 = vmatprep.subr.bf16.mxu0 0
    %368 = vmatpush1.bf16.msra.mxu0 0
    %369 = vmatprep.subr.bf16.mxu0 0
    %370 = vmatpush1.bf16.msra.mxu0 0
    %371 = vmatprep.subr.bf16.mxu0 0
    %372 = vmatpush1.bf16.msra.mxu0 0
    %373 = vmatprep.subr.bf16.mxu0 0
    %374 = vmatpush1.bf16.msra.mxu0 0
    %375 = vmatprep.mubr.bf16.mxu0 0
    %376 = vmatmul.mubr.bf16.gmra.mrb[0].mxu0 %v341
    %v377 = vpop.f32.mrb[0].mxu0
    %v378 = vadd.f32 %v314, %v377
    %v379 = vpop.f32.mrb[0].mxu0
    %v380 = vpop.f32.mrb[0].mxu0
    %v381 = vpop.f32.mrb[0].mxu0
    %382 = vdwg.mxu0
    %v383 = vmax.f32 %v378, 0.0
    %v384 = vpack.c.bf16 %v383, %v383
    %v385 = vld [vmem:[%s9] sm:$0xf]
    %v386 = vld [vmem:[%s9 + $0x4] sm:$0xf]
    %v387 = vld [vmem:[%s9 + $0x8] sm:$0xf]
    %v388 = vld [vmem:[%s9 + $0xc] sm:$0xf]
    %v389 = vld [vmem:[%s9 + $0x10] sm:$0xf]
    %v390 = vld [vmem:[%s9 + $0x14] sm:$0xf]
    %v391 = vld [vmem:[%s9 + $0x18] sm:$0xf]
    %v392 = vld [vmem:[%s9 + $0x1c] sm:$0xf]
    %v393 = vld [vmem:[%s9 + $0x20] sm:$0xf]
    %v394 = vld [vmem:[%s9 + $0x24] sm:$0xf]
    %v395 = vld [vmem:[%s9 + $0x28] sm:$0xf]
    %v396 = vld [vmem:[%s9 + $0x2c] sm:$0xf]
    %v397 = vld [vmem:[%s9 + $0x30] sm:$0xf]
    %v398 = vld [vmem:[%s9 + $0x34] sm:$0xf]
    %v399 = vld [vmem:[%s9 + $0x38] sm:$0xf]
    %v400 = vld [vmem:[%s9 + $0x3c] sm:$0xf]
    %v401 = vld [vmem:[%s10] sm:$0x1]
    %v403 = vlaneseq
    %v404 = vshrl.u32 %v403, 7
    %v405 = vsub.s32 0, %v404
    %v406 = vrot.slane %v401, %v405
    %v424 = vunpack.c.l.b16 %v385
    %v425 = vunpack.c.l.b16 %v386
    %v426 = vunpack.c.l.b16 %v387
    %v427 = vunpack.c.l.b16 %v388
    %v428 = vunpack.c.l.b16 %v389
    %v429 = vunpack.c.l.b16 %v390
    %v430 = vunpack.c.l.b16 %v391
    %v431 = vunpack.c.l.b16 %v392
    %v432 = vunpack.c.l.b16 %v393
    %v433 = vunpack.c.l.b16 %v394
    %v434 = vunpack.c.l.b16 %v395
    %v435 = vunpack.c.l.b16 %v396
    %v436 = vunpack.c.l.b16 %v397
    %v437 = vunpack.c.l.b16 %v398
    %v438 = vunpack.c.l.b16 %v399
    %v439 = vunpack.c.l.b16 %v400
    %v440 = vpack.c.b16 %v425, %v424
    %v441 = vpack.c.b16 %v427, %v426
    %v442 = vpack.c.b16 %v429, %v428
    %v443 = vpack.c.b16 %v431, %v430
    %v444 = vpack.c.b16 %v433, %v432
    %v445 = vpack.c.b16 %v435, %v434
    %v446 = vpack.c.b16 %v437, %v436
    %v447 = vpack.c.b16 %v439, %v438
    %456 = vmatprep.subr.bf16.mxu0 0
    %457 = vmatpush1.bf16.msra.mxu0 %v440
    %458 = vmatprep.subr.bf16.mxu0 0
    %459 = vmatpush1.bf16.msra.mxu0 %v441
    %460 = vmatprep.subr.bf16.mxu0 0
    %461 = vmatpush1.bf16.msra.mxu0 %v442
    %462 = vmatprep.subr.bf16.mxu0 0
    %463 = vmatpush1.bf16.msra.mxu0 %v443
    %464 = vmatprep.subr.bf16.mxu0 0
    %465 = vmatpush1.bf16.msra.mxu0 %v444
    %466 = vmatprep.subr.bf16.mxu0 0
    %467 = vmatpush1.bf16.msra.mxu0 %v445
    %468 = vmatprep.subr.bf16.mxu0 0
    %469 = vmatpush1.bf16.msra.mxu0 %v446
    %470 = vmatprep.subr.bf16.mxu0 0
    %471 = vmatpush1.bf16.msra.mxu0 %v447
    %472 = vmatprep.subr.bf16.mxu0 0
    %473 = vmatpush1.bf16.msra.mxu0 0
    %474 = vmatprep.subr.bf16.mxu0 0
    %475 = vmatpush1.bf16.msra.mxu0 0
    %476 = vmatprep.subr.bf16.mxu0 0
    %477 = vmatpush1.bf16.msra.mxu0 0
    %478 = vmatprep.subr.bf16.mxu0 0
    %479 = vmatpush1.bf16.msra.mxu0 0
    %480 = vmatprep.subr.bf16.mxu0 0
    %481 = vmatpush1.bf16.msra.mxu0 0
    %482 = vmatprep.subr.bf16.mxu0 0
    %483 = vmatpush1.bf16.msra.mxu0 0
    %484 = vmatprep.subr.bf16.mxu0 0
    %485 = vmatpush1.bf16.msra.mxu0 0
    %486 = vmatprep.subr.bf16.mxu0 0
    %487 = vmatpush1.bf16.msra.mxu0 0
    %488 = vmatprep.mubr.bf16.mxu0 0
    %489 = vmatmul.mubr.bf16.gmra.mrb[0].mxu0 %v384
    %v490 = vpop.f32.mrb[0].mxu0
    %v491 = vadd.f32 %v406, %v490
    %v492 = vpop.f32.mrb[0].mxu0
    %v493 = vpop.f32.mrb[0].mxu0
    %v494 = vpop.f32.mrb[0].mxu0
    %495 = vdwg.mxu0
    %vm496 = vcmask 64512
    %497 = vst.msk [vmem:[#allocation2] sm:$0xff] %vm496, %v491
    // Predicated region
    $region46: #{tpu_custom_call.1} parent=1 // pred_check
      _
    $region47: #{tpu_custom_call.1} parent=1 // pred_check_branch
      %499 = sbr.rel (0) target = $region49
    $region48: #{tpu_custom_call.1} parent=1 // pred_region
      %s501 = ssub.s32 128, 128
      %502 = vsyncadd [#allocation3], %s501
      %s504 = sshll.u32 [#allocation2], 4
      %s505 = int_to_ptr.vmem [resolvable:$true] %s504
      %507 = dma.vmem_to_hbm [thread:$0]  %s505, 128, %s11, [#allocation3]
    $region49: #{tpu_custom_call.1} parent=1 // pred_fallthru
      _
    // Predicated region
    $region50: #{tpu_custom_call.1} parent=1 // pred_check
      _
    $region51: #{tpu_custom_call.1} parent=1 // pred_check_branch
      %509 = sbr.rel (0) target = $region53
    $region52: #{tpu_custom_call.1} parent=1 // pred_region
      %510 = dma.done [#allocation3], 128
    $region53: #{tpu_custom_call.1} parent=1 // pred_fallthru
      _
    %511 = vsyncpa [#allocation3], 1

</llo_original>
